<compile_context>
chip_gen: v5e
topology: v5e:2x2
jax: 0.10.0
libtpu: 0.0.40
codegen_flags: <defaults>
</compile_context>

<pallas_src>
import functools

import jax
import jax.numpy as jnp
import numpy as np
from jax.experimental import pallas as pl
from jax.experimental.pallas import tpu as pltpu

_LN_EPS = 1e-5  # torch.nn.LayerNorm default


def _prenorm_attention_kernel(x_ref, gamma_ref, beta_ref,
                              wqkv_ref, wproj_ref, bproj_ref,
                              o_ref, *, num_heads, head_dim, n_actual, block_b):
    """One grid step = `block_b` batch elements.

    x_ref     : (block_b, Np, C) f32   (Np = N padded to a multiple of 8)
    gamma_ref : (1, C)           f32   LayerNorm weight
    beta_ref  : (1, C)           f32   LayerNorm bias
    wqkv_ref  : (C, 3C)          bf16  fused qkv weight, W_q pre-scaled by 1/sqrt(hd)
    wproj_ref : (C, C)           bf16  output projection weight (transposed)
    bproj_ref : (1, C)           f32   output projection bias
    o_ref     : (block_b, Np, C)
    """
    gamma = gamma_ref[...]
    beta = beta_ref[...]
    bproj = bproj_ref[...]
    wqkv = wqkv_ref[...]                      # (C, 3C) bf16
    wproj = wproj_ref[...]                    # (C, C)  bf16

    c = gamma.shape[-1]
    n_pad = x_ref.shape[1]
    hd = head_dim

    # Key-padding mask (trace-time constant shape); only built when padding exists.
    if n_pad != n_actual:
        col_ids = jax.lax.broadcasted_iota(jnp.int32, (n_pad, n_pad), 1)
        pad_key = col_ids >= n_actual         # True on padded key columns
    else:
        pad_key = None

    @pl.loop(0, block_b)                      # scf.for: constant vreg pressure vs. unroll
    def _(bi):
        x = x_ref[bi].astype(jnp.float32)     # (Np, C)

        # ---- PreNorm: LayerNorm over channels, f32 ----
        mu = jnp.mean(x, axis=-1, keepdims=True)
        xc = x - mu
        var = jnp.mean(xc * xc, axis=-1, keepdims=True)
        xn = xc * jax.lax.rsqrt(var + _LN_EPS) * gamma + beta      # (Np, C)

        # ---- fn = SelfAttention ----
        # Fused QKV projection: single K=C, lane-dense matmul on the MXU.
        xb = xn.astype(jnp.bfloat16)
        qkv = jnp.dot(xb, wqkv, preferred_element_type=jnp.float32)  # (Np, 3C) f32

        ctx_heads = []
        for h in range(num_heads):            # per-head (N,N) scores are intrinsic
            q_h = qkv[:, h * hd:(h + 1) * hd].astype(jnp.bfloat16)             # (Np, hd)
            k_h = qkv[:, c + h * hd: c + (h + 1) * hd].astype(jnp.bfloat16)
            v_h = qkv[:, 2 * c + h * hd: 2 * c + (h + 1) * hd].astype(jnp.bfloat16)

            # scale already folded into W_q wrapper-side
            s = jnp.einsum('nd,md->nm', q_h, k_h,
                           preferred_element_type=jnp.float32)                 # (Np, Np)
            if pad_key is not None:
                s = jnp.where(pad_key, -jnp.inf, s)

            s = s - jnp.max(s, axis=-1, keepdims=True)
            p = jnp.exp(s)
            denom = jnp.sum(p, axis=-1, keepdims=True)                         # (Np, 1)

            ctx = jnp.einsum('nm,md->nd', p.astype(jnp.bfloat16), v_h,
                             preferred_element_type=jnp.float32)               # (Np, hd)
            # deferred softmax normalization (O(N*hd) instead of O(N^2))
            ctx = ctx * pl.reciprocal(denom, approx=True)
            ctx_heads.append(ctx.astype(jnp.bfloat16))

        ctx_all = jnp.concatenate(ctx_heads, axis=-1)                          # (Np, C)

        # Output projection with the head re-merge folded in: one K=C matmul.
        y = jnp.dot(ctx_all, wproj, preferred_element_type=jnp.float32) + bproj
        o_ref[bi] = y.astype(o_ref.dtype)


def _vmem_cap_bytes():
    """Per-core VMEM capacity (128 MiB v5e/v6e, 64 MiB v7x); conservative fallback."""
    try:
        info = pltpu.get_tpu_info()
        for attr in ("vmem_capacity_bytes", "vmem_bytes", "vmem_size_bytes"):
            v = getattr(info, attr, None)
            if v:
                return int(v)
    except Exception:
        pass
    return 64 * 2 ** 20


def prenorm_attention_pallas(x, gamma, beta, wqkv, wproj, bproj, *,
                             num_heads, block_b=1):
    """x: (B, N, C); gamma/beta: (C,); wqkv: (3C, C); wproj: (C, C); bproj: (C,).
    Weight layouts match torch (y = x @ W.T + b); all re-layout is wrapper-side."""
    B, N, C = x.shape
    assert C % num_heads == 0
    hd = C // num_heads
    scale = hd ** (-0.5)
    if B % block_b != 0:
        block_b = 1

    # Pad the sequence axis to a multiple of 8 (sublane); padded keys masked in-kernel.
    n_pad = ((N + 7) // 8) * 8
    x_p = jnp.pad(x, ((0, 0), (0, n_pad - N), (0, 0))) if n_pad != N else x

    # ---- wrapper-side weight re-layout (free) ----
    w = jnp.asarray(wqkv, jnp.float32)
    w = w.at[:C, :].multiply(scale)                    # fold softmax scale into W_q
    wqkv_t = w.T.astype(jnp.bfloat16)                  # (C, 3C)
    wproj_t = jnp.asarray(wproj, jnp.float32).T.astype(jnp.bfloat16)  # (C, C)

    gamma2 = jnp.asarray(gamma, jnp.float32).reshape(1, C)
    beta2 = jnp.asarray(beta, jnp.float32).reshape(1, C)
    bproj2 = jnp.asarray(bproj, jnp.float32).reshape(1, C)

    kernel = functools.partial(_prenorm_attention_kernel,
                               num_heads=num_heads, head_dim=hd,
                               n_actual=N, block_b=block_b)

    # VMEM budget: weights + double-buffered in/out blocks + in-kernel intermediates
    # (fused qkv, one head's scores/probs, LN/ctx/y slabs), 2x headroom, capped at
    # 3/4 of the queried per-core VMEM so it is valid on v5e/v6e (128 MiB) and v7x (64 MiB).
    est = (4 * C * C * 2                              # bf16 wqkv + wproj
           + 2 * 2 * block_b * n_pad * C * 4          # double-buffered f32 in/out
           + n_pad * 3 * C * 4                        # qkv f32
           + 2 * n_pad * n_pad * 4                    # scores + probs (one head live)
           + 6 * n_pad * C * 4)                       # LN / ctx / y slack
    vmem_limit = int(min(_vmem_cap_bytes() * 3 // 4, max(16 * 2 ** 20, 2 * est)))

    out = pl.pallas_call(
        kernel,
        out_shape=jax.ShapeDtypeStruct((B, n_pad, C), x.dtype),
        grid_spec=pltpu.PrefetchScalarGridSpec(
            num_scalar_prefetch=0,
            grid=(B // block_b,),
            in_specs=[
                pl.BlockSpec((block_b, n_pad, C), lambda b: (b, 0, 0)),   # x
                pl.BlockSpec((1, C), lambda b: (0, 0)),                    # gamma
                pl.BlockSpec((1, C), lambda b: (0, 0)),                    # beta
                pl.BlockSpec((C, 3 * C), lambda b: (0, 0)),                # wqkv (fused)
                pl.BlockSpec((C, C), lambda b: (0, 0)),                    # wproj
                pl.BlockSpec((1, C), lambda b: (0, 0)),                    # bproj
            ],
            out_specs=pl.BlockSpec((block_b, n_pad, C), lambda b: (b, 0, 0)),
        ),
        compiler_params=pltpu.CompilerParams(
            dimension_semantics=("parallel",),
            vmem_limit_bytes=vmem_limit),
    )(x_p, gamma2, beta2, wqkv_t, wproj_t, bproj2)

    return out[:, :N, :] if n_pad != N else out


def prenorm_attention_ref(x, gamma, beta, wqkv, wproj, bproj, *, num_heads):
    """Pure-JAX f32 reference matching the PyTorch PreNorm(LayerNorm, Attention) forward."""
    B, N, C = x.shape
    hd = C // num_heads
    scale = hd ** (-0.5)
    mu = jnp.mean(x, axis=-1, keepdims=True)
    var = jnp.mean((x - mu) ** 2, axis=-1, keepdims=True)
    xn = (x - mu) / jnp.sqrt(var + _LN_EPS) * gamma + beta
    qkv = xn @ wqkv.T                                            # (B, N, 3C)
    qkv = qkv.reshape(B, N, 3, num_heads, hd).transpose(2, 0, 3, 1, 4)
    q, k, v = qkv[0], qkv[1], qkv[2]                             # (B, H, N, hd)
    attn = (q @ jnp.swapaxes(k, -2, -1)) * scale
    attn = jax.nn.softmax(attn, axis=-1)
    out = (attn @ v).transpose(0, 2, 1, 3).reshape(B, N, C)
    return out @ wproj.T + bproj


def _run_case(key, B, N, C, heads):
    k1, k2, k3, k4, k5, k6 = jax.random.split(key, 6)
    x = jax.random.normal(k1, (B, N, C), dtype=jnp.float32)
    gamma = 1.0 + 0.1 * jax.random.normal(k5, (C,), dtype=jnp.float32)
    beta = 0.1 * jax.random.normal(k6, (C,), dtype=jnp.float32)
    wqkv = jax.random.normal(k2, (3 * C, C), dtype=jnp.float32) * 0.05
    wproj = jax.random.normal(k3, (C, C), dtype=jnp.float32) * 0.05
    bproj = jax.random.normal(k4, (C,), dtype=jnp.float32) * 0.05

    y = prenorm_attention_pallas(x, gamma, beta, wqkv, wproj, bproj,
                                 num_heads=heads, block_b=1)
    y = jax.block_until_ready(y)
    y_ref = prenorm_attention_ref(x, gamma, beta, wqkv, wproj, bproj, num_heads=heads)
    np.testing.assert_allclose(np.asarray(y), np.asarray(y_ref), rtol=2e-2, atol=2e-2)


if __name__ == "__main__":
    key = jax.random.PRNGKey(0)
    k_a, k_b = jax.random.split(key, 2)

    # aligned sequence length
    _run_case(k_a, B=2, N=8, C=32, heads=8)
    # unaligned sequence length (exercises the pad + key-mask path)
    _run_case(k_b, B=2, N=6, C=32, heads=4)

    print("KERNEL_OK")
</pallas_src>

<mosaic_0001>
module attributes {stable_mosaic.version = 11 : i64} {
  func.func @_prenorm_attention_kernel(%arg0: i32, %arg1: memref<1x8x32xf32, #tpu.memory_space<vmem>>, %arg2: memref<1x32xf32, #tpu.memory_space<vmem>>, %arg3: memref<1x32xf32, #tpu.memory_space<vmem>>, %arg4: memref<32x96xbf16, #tpu.memory_space<vmem>>, %arg5: memref<32x32xbf16, #tpu.memory_space<vmem>>, %arg6: memref<1x32xf32, #tpu.memory_space<vmem>>, %arg7: memref<1x8x32xf32, #tpu.memory_space<vmem>>) attributes {dimension_semantics = [#tpu.dimension_semantics<parallel>], iteration_bounds = array<i64: 2>, scalar_prefetch = 0 : i64, scratch_operands = 0 : i64, tpu.core_type = #tpu.core_type<tc>, window_params = [{transform_indices = @transform_0, window_bounds = array<i64: 1, 8, 32>}, {pipeline_mode = #tpu.pipeline_mode<synchronous>, transform_indices = @transform_1, window_bounds = array<i64: 1, 32>}, {pipeline_mode = #tpu.pipeline_mode<synchronous>, transform_indices = @transform_2, window_bounds = array<i64: 1, 32>}, {pipeline_mode = #tpu.pipeline_mode<synchronous>, transform_indices = @transform_3, window_bounds = array<i64: 32, 96>}, {pipeline_mode = #tpu.pipeline_mode<synchronous>, transform_indices = @transform_4, window_bounds = array<i64: 32, 32>}, {pipeline_mode = #tpu.pipeline_mode<synchronous>, transform_indices = @transform_5, window_bounds = array<i64: 1, 32>}, {transform_indices = @transform_6, window_bounds = array<i64: 1, 8, 32>}]} {
    %c0 = arith.constant 0 : index
    %c0_0 = arith.constant 0 : index
    %0 = vector.load %arg2[%c0, %c0_0] : memref<1x32xf32, #tpu.memory_space<vmem>>, vector<1x32xf32>
    %c0_1 = arith.constant 0 : index
    %c0_2 = arith.constant 0 : index
    %1 = vector.load %arg3[%c0_1, %c0_2] : memref<1x32xf32, #tpu.memory_space<vmem>>, vector<1x32xf32>
    %c0_3 = arith.constant 0 : index
    %c0_4 = arith.constant 0 : index
    %2 = vector.load %arg6[%c0_3, %c0_4] : memref<1x32xf32, #tpu.memory_space<vmem>>, vector<1x32xf32>
    %c0_5 = arith.constant 0 : index
    %c0_6 = arith.constant 0 : index
    %3 = vector.load %arg4[%c0_5, %c0_6] : memref<32x96xbf16, #tpu.memory_space<vmem>>, vector<32x96xbf16>
    %c0_7 = arith.constant 0 : index
    %c0_8 = arith.constant 0 : index
    %4 = vector.load %arg5[%c0_7, %c0_8] : memref<32x32xbf16, #tpu.memory_space<vmem>>, vector<32x32xbf16>
    %c0_i32 = arith.constant 0 : i32
    %c1_i32 = arith.constant 1 : i32
    %5 = arith.muli %c0_i32, %c1_i32 : i32
    %c0_i32_9 = arith.constant 0 : i32
    %6 = arith.addi %c0_i32_9, %5 : i32
    %7 = arith.index_cast %6 : i32 to index
    %c0_10 = arith.constant 0 : index
    %c0_11 = arith.constant 0 : index
    %8 = vector.load %arg1[%7, %c0_10, %c0_11] : memref<1x8x32xf32, #tpu.memory_space<vmem>>, vector<1x8x32xf32>
    %9 = vector.shape_cast %8 : vector<1x8x32xf32> to vector<8x32xf32>
    %cst = arith.constant dense<0.000000e+00> : vector<8xf32>
    %10 = vector.multi_reduction <add>, %9, %cst [1] : vector<8x32xf32> to vector<8xf32>
    %11 = vector.shape_cast %10 : vector<8xf32> to vector<8x1xf32>
    %cst_12 = arith.constant 3.200000e+01 : f32
    %12 = vector.broadcast %cst_12 : f32 to vector<8x1xf32>
    %13 = arith.divf %11, %12 : vector<8x1xf32>
    %14 = vector.broadcast %13 : vector<8x1xf32> to vector<8x32xf32>
    %15 = arith.subf %9, %14 : vector<8x32xf32>
    %16 = arith.mulf %15, %15 : vector<8x32xf32>
    %cst_13 = arith.constant dense<0.000000e+00> : vector<8xf32>
    %17 = vector.multi_reduction <add>, %16, %cst_13 [1] : vector<8x32xf32> to vector<8xf32>
    %18 = vector.shape_cast %17 : vector<8xf32> to vector<8x1xf32>
    %cst_14 = arith.constant 3.200000e+01 : f32
    %19 = vector.broadcast %cst_14 : f32 to vector<8x1xf32>
    %20 = arith.divf %18, %19 : vector<8x1xf32>
    %cst_15 = arith.constant 9.99999974E-6 : f32
    %21 = vector.broadcast %cst_15 : f32 to vector<8x1xf32>
    %22 = arith.addf %20, %21 : vector<8x1xf32>
    %23 = math.rsqrt %22 : vector<8x1xf32>
    %24 = vector.broadcast %23 : vector<8x1xf32> to vector<8x32xf32>
    %25 = arith.mulf %15, %24 : vector<8x32xf32>
    %26 = vector.broadcast %0 : vector<1x32xf32> to vector<8x32xf32>
    %27 = arith.mulf %25, %26 : vector<8x32xf32>
    %28 = vector.broadcast %1 : vector<1x32xf32> to vector<8x32xf32>
    %29 = arith.addf %27, %28 : vector<8x32xf32>
    %30 = arith.truncf %29 : vector<8x32xf32> to vector<8x32xbf16>
    %cst_16 = arith.constant dense<0.000000e+00> : vector<8x96xf32>
    %31 = tpu.matmul %30, %3, %cst_16 {dimension_numbers = #tpu.dot_dimension_numbers<[1], [0], [0], [1], [0, 0, 1, 1], [], []>} : vector<8x32xbf16>, vector<32x96xbf16>, vector<8x96xf32> -> vector<8x96xf32>
    %32 = vector.extract_strided_slice %31 {offsets = [0, 0], sizes = [8, 4], strides = [1, 1]} : vector<8x96xf32> to vector<8x4xf32>
    %33 = arith.truncf %32 : vector<8x4xf32> to vector<8x4xbf16>
    %34 = vector.extract_strided_slice %31 {offsets = [0, 32], sizes = [8, 4], strides = [1, 1]} : vector<8x96xf32> to vector<8x4xf32>
    %35 = arith.truncf %34 : vector<8x4xf32> to vector<8x4xbf16>
    %36 = vector.extract_strided_slice %31 {offsets = [0, 64], sizes = [8, 4], strides = [1, 1]} : vector<8x96xf32> to vector<8x4xf32>
    %37 = arith.truncf %36 : vector<8x4xf32> to vector<8x4xbf16>
    "tpu.trace_start"() <{level = 10 : i32, message = "nd,md->nm"}> : () -> ()
    %cst_17 = arith.constant dense<0.000000e+00> : vector<8x8xf32>
    %38 = tpu.matmul %33, %35, %cst_17 {dimension_numbers = #tpu.dot_dimension_numbers<[1], [1], [0], [0], [0, 0, 1, 0], [], []>} : vector<8x4xbf16>, vector<8x4xbf16>, vector<8x8xf32> -> vector<8x8xf32>
    "tpu.trace_stop"() : () -> ()
    %cst_18 = arith.constant dense<0xFF800000> : vector<8xf32>
    %39 = vector.multi_reduction <maximumf>, %38, %cst_18 [1] : vector<8x8xf32> to vector<8xf32>
    %40 = vector.shape_cast %39 : vector<8xf32> to vector<8x1xf32>
    %41 = vector.broadcast %40 : vector<8x1xf32> to vector<8x8xf32>
    %42 = arith.subf %38, %41 : vector<8x8xf32>
    %43 = math.exp %42 : vector<8x8xf32>
    %cst_19 = arith.constant dense<0.000000e+00> : vector<8xf32>
    %44 = vector.multi_reduction <add>, %43, %cst_19 [1] : vector<8x8xf32> to vector<8xf32>
    %45 = vector.shape_cast %44 : vector<8xf32> to vector<8x1xf32>
    %46 = arith.truncf %43 : vector<8x8xf32> to vector<8x8xbf16>
    "tpu.trace_start"() <{level = 10 : i32, message = "nm,md->nd"}> : () -> ()
    %cst_20 = arith.constant dense<0.000000e+00> : vector<8x4xf32>
    %47 = tpu.matmul %46, %37, %cst_20 {dimension_numbers = #tpu.dot_dimension_numbers<[1], [0], [0], [1], [0, 0, 1, 1], [], []>} : vector<8x8xbf16>, vector<8x4xbf16>, vector<8x4xf32> -> vector<8x4xf32>
    "tpu.trace_stop"() : () -> ()
    %48 = tpu.reciprocal %45 {approx = true} : vector<8x1xf32> -> vector<8x1xf32>
    %49 = vector.broadcast %48 : vector<8x1xf32> to vector<8x4xf32>
    %50 = arith.mulf %47, %49 : vector<8x4xf32>
    %51 = arith.truncf %50 : vector<8x4xf32> to vector<8x4xbf16>
    %52 = vector.extract_strided_slice %31 {offsets = [0, 4], sizes = [8, 4], strides = [1, 1]} : vector<8x96xf32> to vector<8x4xf32>
    %53 = arith.truncf %52 : vector<8x4xf32> to vector<8x4xbf16>
    %54 = vector.extract_strided_slice %31 {offsets = [0, 36], sizes = [8, 4], strides = [1, 1]} : vector<8x96xf32> to vector<8x4xf32>
    %55 = arith.truncf %54 : vector<8x4xf32> to vector<8x4xbf16>
    %56 = vector.extract_strided_slice %31 {offsets = [0, 68], sizes = [8, 4], strides = [1, 1]} : vector<8x96xf32> to vector<8x4xf32>
    %57 = arith.truncf %56 : vector<8x4xf32> to vector<8x4xbf16>
    "tpu.trace_start"() <{level = 10 : i32, message = "nd,md->nm"}> : () -> ()
    %cst_21 = arith.constant dense<0.000000e+00> : vector<8x8xf32>
    %58 = tpu.matmul %53, %55, %cst_21 {dimension_numbers = #tpu.dot_dimension_numbers<[1], [1], [0], [0], [0, 0, 1, 0], [], []>} : vector<8x4xbf16>, vector<8x4xbf16>, vector<8x8xf32> -> vector<8x8xf32>
    "tpu.trace_stop"() : () -> ()
    %cst_22 = arith.constant dense<0xFF800000> : vector<8xf32>
    %59 = vector.multi_reduction <maximumf>, %58, %cst_22 [1] : vector<8x8xf32> to vector<8xf32>
    %60 = vector.shape_cast %59 : vector<8xf32> to vector<8x1xf32>
    %61 = vector.broadcast %60 : vector<8x1xf32> to vector<8x8xf32>
    %62 = arith.subf %58, %61 : vector<8x8xf32>
    %63 = math.exp %62 : vector<8x8xf32>
    %cst_23 = arith.constant dense<0.000000e+00> : vector<8xf32>
    %64 = vector.multi_reduction <add>, %63, %cst_23 [1] : vector<8x8xf32> to vector<8xf32>
    %65 = vector.shape_cast %64 : vector<8xf32> to vector<8x1xf32>
    %66 = arith.truncf %63 : vector<8x8xf32> to vector<8x8xbf16>
    "tpu.trace_start"() <{level = 10 : i32, message = "nm,md->nd"}> : () -> ()
    %cst_24 = arith.constant dense<0.000000e+00> : vector<8x4xf32>
    %67 = tpu.matmul %66, %57, %cst_24 {dimension_numbers = #tpu.dot_dimension_numbers<[1], [0], [0], [1], [0, 0, 1, 1], [], []>} : vector<8x8xbf16>, vector<8x4xbf16>, vector<8x4xf32> -> vector<8x4xf32>
    "tpu.trace_stop"() : () -> ()
    %68 = tpu.reciprocal %65 {approx = true} : vector<8x1xf32> -> vector<8x1xf32>
    %69 = vector.broadcast %68 : vector<8x1xf32> to vector<8x4xf32>
    %70 = arith.mulf %67, %69 : vector<8x4xf32>
    %71 = arith.truncf %70 : vector<8x4xf32> to vector<8x4xbf16>
    %72 = vector.extract_strided_slice %31 {offsets = [0, 8], sizes = [8, 4], strides = [1, 1]} : vector<8x96xf32> to vector<8x4xf32>
    %73 = arith.truncf %72 : vector<8x4xf32> to vector<8x4xbf16>
    %74 = vector.extract_strided_slice %31 {offsets = [0, 40], sizes = [8, 4], strides = [1, 1]} : vector<8x96xf32> to vector<8x4xf32>
    %75 = arith.truncf %74 : vector<8x4xf32> to vector<8x4xbf16>
    %76 = vector.extract_strided_slice %31 {offsets = [0, 72], sizes = [8, 4], strides = [1, 1]} : vector<8x96xf32> to vector<8x4xf32>
    %77 = arith.truncf %76 : vector<8x4xf32> to vector<8x4xbf16>
    "tpu.trace_start"() <{level = 10 : i32, message = "nd,md->nm"}> : () -> ()
    %cst_25 = arith.constant dense<0.000000e+00> : vector<8x8xf32>
    %78 = tpu.matmul %73, %75, %cst_25 {dimension_numbers = #tpu.dot_dimension_numbers<[1], [1], [0], [0], [0, 0, 1, 0], [], []>} : vector<8x4xbf16>, vector<8x4xbf16>, vector<8x8xf32> -> vector<8x8xf32>
    "tpu.trace_stop"() : () -> ()
    %cst_26 = arith.constant dense<0xFF800000> : vector<8xf32>
    %79 = vector.multi_reduction <maximumf>, %78, %cst_26 [1] : vector<8x8xf32> to vector<8xf32>
    %80 = vector.shape_cast %79 : vector<8xf32> to vector<8x1xf32>
    %81 = vector.broadcast %80 : vector<8x1xf32> to vector<8x8xf32>
    %82 = arith.subf %78, %81 : vector<8x8xf32>
    %83 = math.exp %82 : vector<8x8xf32>
    %cst_27 = arith.constant dense<0.000000e+00> : vector<8xf32>
    %84 = vector.multi_reduction <add>, %83, %cst_27 [1] : vector<8x8xf32> to vector<8xf32>
    %85 = vector.shape_cast %84 : vector<8xf32> to vector<8x1xf32>
    %86 = arith.truncf %83 : vector<8x8xf32> to vector<8x8xbf16>
    "tpu.trace_start"() <{level = 10 : i32, message = "nm,md->nd"}> : () -> ()
    %cst_28 = arith.constant dense<0.000000e+00> : vector<8x4xf32>
    %87 = tpu.matmul %86, %77, %cst_28 {dimension_numbers = #tpu.dot_dimension_numbers<[1], [0], [0], [1], [0, 0, 1, 1], [], []>} : vector<8x8xbf16>, vector<8x4xbf16>, vector<8x4xf32> -> vector<8x4xf32>
    "tpu.trace_stop"() : () -> ()
    %88 = tpu.reciprocal %85 {approx = true} : vector<8x1xf32> -> vector<8x1xf32>
    %89 = vector.broadcast %88 : vector<8x1xf32> to vector<8x4xf32>
    %90 = arith.mulf %87, %89 : vector<8x4xf32>
    %91 = arith.truncf %90 : vector<8x4xf32> to vector<8x4xbf16>
    %92 = vector.extract_strided_slice %31 {offsets = [0, 12], sizes = [8, 4], strides = [1, 1]} : vector<8x96xf32> to vector<8x4xf32>
    %93 = arith.truncf %92 : vector<8x4xf32> to vector<8x4xbf16>
    %94 = vector.extract_strided_slice %31 {offsets = [0, 44], sizes = [8, 4], strides = [1, 1]} : vector<8x96xf32> to vector<8x4xf32>
    %95 = arith.truncf %94 : vector<8x4xf32> to vector<8x4xbf16>
    %96 = vector.extract_strided_slice %31 {offsets = [0, 76], sizes = [8, 4], strides = [1, 1]} : vector<8x96xf32> to vector<8x4xf32>
    %97 = arith.truncf %96 : vector<8x4xf32> to vector<8x4xbf16>
    "tpu.trace_start"() <{level = 10 : i32, message = "nd,md->nm"}> : () -> ()
    %cst_29 = arith.constant dense<0.000000e+00> : vector<8x8xf32>
    %98 = tpu.matmul %93, %95, %cst_29 {dimension_numbers = #tpu.dot_dimension_numbers<[1], [1], [0], [0], [0, 0, 1, 0], [], []>} : vector<8x4xbf16>, vector<8x4xbf16>, vector<8x8xf32> -> vector<8x8xf32>
    "tpu.trace_stop"() : () -> ()
    %cst_30 = arith.constant dense<0xFF800000> : vector<8xf32>
    %99 = vector.multi_reduction <maximumf>, %98, %cst_30 [1] : vector<8x8xf32> to vector<8xf32>
    %100 = vector.shape_cast %99 : vector<8xf32> to vector<8x1xf32>
    %101 = vector.broadcast %100 : vector<8x1xf32> to vector<8x8xf32>
    %102 = arith.subf %98, %101 : vector<8x8xf32>
    %103 = math.exp %102 : vector<8x8xf32>
    %cst_31 = arith.constant dense<0.000000e+00> : vector<8xf32>
    %104 = vector.multi_reduction <add>, %103, %cst_31 [1] : vector<8x8xf32> to vector<8xf32>
    %105 = vector.shape_cast %104 : vector<8xf32> to vector<8x1xf32>
    %106 = arith.truncf %103 : vector<8x8xf32> to vector<8x8xbf16>
    "tpu.trace_start"() <{level = 10 : i32, message = "nm,md->nd"}> : () -> ()
    %cst_32 = arith.constant dense<0.000000e+00> : vector<8x4xf32>
    %107 = tpu.matmul %106, %97, %cst_32 {dimension_numbers = #tpu.dot_dimension_numbers<[1], [0], [0], [1], [0, 0, 1, 1], [], []>} : vector<8x8xbf16>, vector<8x4xbf16>, vector<8x4xf32> -> vector<8x4xf32>
    "tpu.trace_stop"() : () -> ()
    %108 = tpu.reciprocal %105 {approx = true} : vector<8x1xf32> -> vector<8x1xf32>
    %109 = vector.broadcast %108 : vector<8x1xf32> to vector<8x4xf32>
    %110 = arith.mulf %107, %109 : vector<8x4xf32>
    %111 = arith.truncf %110 : vector<8x4xf32> to vector<8x4xbf16>
    %112 = vector.extract_strided_slice %31 {offsets = [0, 16], sizes = [8, 4], strides = [1, 1]} : vector<8x96xf32> to vector<8x4xf32>
    %113 = arith.truncf %112 : vector<8x4xf32> to vector<8x4xbf16>
    %114 = vector.extract_strided_slice %31 {offsets = [0, 48], sizes = [8, 4], strides = [1, 1]} : vector<8x96xf32> to vector<8x4xf32>
    %115 = arith.truncf %114 : vector<8x4xf32> to vector<8x4xbf16>
    %116 = vector.extract_strided_slice %31 {offsets = [0, 80], sizes = [8, 4], strides = [1, 1]} : vector<8x96xf32> to vector<8x4xf32>
    %117 = arith.truncf %116 : vector<8x4xf32> to vector<8x4xbf16>
    "tpu.trace_start"() <{level = 10 : i32, message = "nd,md->nm"}> : () -> ()
    %cst_33 = arith.constant dense<0.000000e+00> : vector<8x8xf32>
    %118 = tpu.matmul %113, %115, %cst_33 {dimension_numbers = #tpu.dot_dimension_numbers<[1], [1], [0], [0], [0, 0, 1, 0], [], []>} : vector<8x4xbf16>, vector<8x4xbf16>, vector<8x8xf32> -> vector<8x8xf32>
    "tpu.trace_stop"() : () -> ()
    %cst_34 = arith.constant dense<0xFF800000> : vector<8xf32>
    %119 = vector.multi_reduction <maximumf>, %118, %cst_34 [1] : vector<8x8xf32> to vector<8xf32>
    %120 = vector.shape_cast %119 : vector<8xf32> to vector<8x1xf32>
    %121 = vector.broadcast %120 : vector<8x1xf32> to vector<8x8xf32>
    %122 = arith.subf %118, %121 : vector<8x8xf32>
    %123 = math.exp %122 : vector<8x8xf32>
    %cst_35 = arith.constant dense<0.000000e+00> : vector<8xf32>
    %124 = vector.multi_reduction <add>, %123, %cst_35 [1] : vector<8x8xf32> to vector<8xf32>
    %125 = vector.shape_cast %124 : vector<8xf32> to vector<8x1xf32>
    %126 = arith.truncf %123 : vector<8x8xf32> to vector<8x8xbf16>
    "tpu.trace_start"() <{level = 10 : i32, message = "nm,md->nd"}> : () -> ()
    %cst_36 = arith.constant dense<0.000000e+00> : vector<8x4xf32>
    %127 = tpu.matmul %126, %117, %cst_36 {dimension_numbers = #tpu.dot_dimension_numbers<[1], [0], [0], [1], [0, 0, 1, 1], [], []>} : vector<8x8xbf16>, vector<8x4xbf16>, vector<8x4xf32> -> vector<8x4xf32>
    "tpu.trace_stop"() : () -> ()
    %128 = tpu.reciprocal %125 {approx = true} : vector<8x1xf32> -> vector<8x1xf32>
    %129 = vector.broadcast %128 : vector<8x1xf32> to vector<8x4xf32>
    %130 = arith.mulf %127, %129 : vector<8x4xf32>
    %131 = arith.truncf %130 : vector<8x4xf32> to vector<8x4xbf16>
    %132 = vector.extract_strided_slice %31 {offsets = [0, 20], sizes = [8, 4], strides = [1, 1]} : vector<8x96xf32> to vector<8x4xf32>
    %133 = arith.truncf %132 : vector<8x4xf32> to vector<8x4xbf16>
    %134 = vector.extract_strided_slice %31 {offsets = [0, 52], sizes = [8, 4], strides = [1, 1]} : vector<8x96xf32> to vector<8x4xf32>
    %135 = arith.truncf %134 : vector<8x4xf32> to vector<8x4xbf16>
    %136 = vector.extract_strided_slice %31 {offsets = [0, 84], sizes = [8, 4], strides = [1, 1]} : vector<8x96xf32> to vector<8x4xf32>
    %137 = arith.truncf %136 : vector<8x4xf32> to vector<8x4xbf16>
    "tpu.trace_start"() <{level = 10 : i32, message = "nd,md->nm"}> : () -> ()
    %cst_37 = arith.constant dense<0.000000e+00> : vector<8x8xf32>
    %138 = tpu.matmul %133, %135, %cst_37 {dimension_numbers = #tpu.dot_dimension_numbers<[1], [1], [0], [0], [0, 0, 1, 0], [], []>} : vector<8x4xbf16>, vector<8x4xbf16>, vector<8x8xf32> -> vector<8x8xf32>
    "tpu.trace_stop"() : () -> ()
    %cst_38 = arith.constant dense<0xFF800000> : vector<8xf32>
    %139 = vector.multi_reduction <maximumf>, %138, %cst_38 [1] : vector<8x8xf32> to vector<8xf32>
    %140 = vector.shape_cast %139 : vector<8xf32> to vector<8x1xf32>
    %141 = vector.broadcast %140 : vector<8x1xf32> to vector<8x8xf32>
    %142 = arith.subf %138, %141 : vector<8x8xf32>
    %143 = math.exp %142 : vector<8x8xf32>
    %cst_39 = arith.constant dense<0.000000e+00> : vector<8xf32>
    %144 = vector.multi_reduction <add>, %143, %cst_39 [1] : vector<8x8xf32> to vector<8xf32>
    %145 = vector.shape_cast %144 : vector<8xf32> to vector<8x1xf32>
    %146 = arith.truncf %143 : vector<8x8xf32> to vector<8x8xbf16>
    "tpu.trace_start"() <{level = 10 : i32, message = "nm,md->nd"}> : () -> ()
    %cst_40 = arith.constant dense<0.000000e+00> : vector<8x4xf32>
    %147 = tpu.matmul %146, %137, %cst_40 {dimension_numbers = #tpu.dot_dimension_numbers<[1], [0], [0], [1], [0, 0, 1, 1], [], []>} : vector<8x8xbf16>, vector<8x4xbf16>, vector<8x4xf32> -> vector<8x4xf32>
    "tpu.trace_stop"() : () -> ()
    %148 = tpu.reciprocal %145 {approx = true} : vector<8x1xf32> -> vector<8x1xf32>
    %149 = vector.broadcast %148 : vector<8x1xf32> to vector<8x4xf32>
    %150 = arith.mulf %147, %149 : vector<8x4xf32>
    %151 = arith.truncf %150 : vector<8x4xf32> to vector<8x4xbf16>
    %152 = vector.extract_strided_slice %31 {offsets = [0, 24], sizes = [8, 4], strides = [1, 1]} : vector<8x96xf32> to vector<8x4xf32>
    %153 = arith.truncf %152 : vector<8x4xf32> to vector<8x4xbf16>
    %154 = vector.extract_strided_slice %31 {offsets = [0, 56], sizes = [8, 4], strides = [1, 1]} : vector<8x96xf32> to vector<8x4xf32>
    %155 = arith.truncf %154 : vector<8x4xf32> to vector<8x4xbf16>
    %156 = vector.extract_strided_slice %31 {offsets = [0, 88], sizes = [8, 4], strides = [1, 1]} : vector<8x96xf32> to vector<8x4xf32>
    %157 = arith.truncf %156 : vector<8x4xf32> to vector<8x4xbf16>
    "tpu.trace_start"() <{level = 10 : i32, message = "nd,md->nm"}> : () -> ()
    %cst_41 = arith.constant dense<0.000000e+00> : vector<8x8xf32>
    %158 = tpu.matmul %153, %155, %cst_41 {dimension_numbers = #tpu.dot_dimension_numbers<[1], [1], [0], [0], [0, 0, 1, 0], [], []>} : vector<8x4xbf16>, vector<8x4xbf16>, vector<8x8xf32> -> vector<8x8xf32>
    "tpu.trace_stop"() : () -> ()
    %cst_42 = arith.constant dense<0xFF800000> : vector<8xf32>
    %159 = vector.multi_reduction <maximumf>, %158, %cst_42 [1] : vector<8x8xf32> to vector<8xf32>
    %160 = vector.shape_cast %159 : vector<8xf32> to vector<8x1xf32>
    %161 = vector.broadcast %160 : vector<8x1xf32> to vector<8x8xf32>
    %162 = arith.subf %158, %161 : vector<8x8xf32>
    %163 = math.exp %162 : vector<8x8xf32>
    %cst_43 = arith.constant dense<0.000000e+00> : vector<8xf32>
    %164 = vector.multi_reduction <add>, %163, %cst_43 [1] : vector<8x8xf32> to vector<8xf32>
    %165 = vector.shape_cast %164 : vector<8xf32> to vector<8x1xf32>
    %166 = arith.truncf %163 : vector<8x8xf32> to vector<8x8xbf16>
    "tpu.trace_start"() <{level = 10 : i32, message = "nm,md->nd"}> : () -> ()
    %cst_44 = arith.constant dense<0.000000e+00> : vector<8x4xf32>
    %167 = tpu.matmul %166, %157, %cst_44 {dimension_numbers = #tpu.dot_dimension_numbers<[1], [0], [0], [1], [0, 0, 1, 1], [], []>} : vector<8x8xbf16>, vector<8x4xbf16>, vector<8x4xf32> -> vector<8x4xf32>
    "tpu.trace_stop"() : () -> ()
    %168 = tpu.reciprocal %165 {approx = true} : vector<8x1xf32> -> vector<8x1xf32>
    %169 = vector.broadcast %168 : vector<8x1xf32> to vector<8x4xf32>
    %170 = arith.mulf %167, %169 : vector<8x4xf32>
    %171 = arith.truncf %170 : vector<8x4xf32> to vector<8x4xbf16>
    %172 = vector.extract_strided_slice %31 {offsets = [0, 28], sizes = [8, 4], strides = [1, 1]} : vector<8x96xf32> to vector<8x4xf32>
    %173 = arith.truncf %172 : vector<8x4xf32> to vector<8x4xbf16>
    %174 = vector.extract_strided_slice %31 {offsets = [0, 60], sizes = [8, 4], strides = [1, 1]} : vector<8x96xf32> to vector<8x4xf32>
    %175 = arith.truncf %174 : vector<8x4xf32> to vector<8x4xbf16>
    %176 = vector.extract_strided_slice %31 {offsets = [0, 92], sizes = [8, 4], strides = [1, 1]} : vector<8x96xf32> to vector<8x4xf32>
    %177 = arith.truncf %176 : vector<8x4xf32> to vector<8x4xbf16>
    "tpu.trace_start"() <{level = 10 : i32, message = "nd,md->nm"}> : () -> ()
    %cst_45 = arith.constant dense<0.000000e+00> : vector<8x8xf32>
    %178 = tpu.matmul %173, %175, %cst_45 {dimension_numbers = #tpu.dot_dimension_numbers<[1], [1], [0], [0], [0, 0, 1, 0], [], []>} : vector<8x4xbf16>, vector<8x4xbf16>, vector<8x8xf32> -> vector<8x8xf32>
    "tpu.trace_stop"() : () -> ()
    %cst_46 = arith.constant dense<0xFF800000> : vector<8xf32>
    %179 = vector.multi_reduction <maximumf>, %178, %cst_46 [1] : vector<8x8xf32> to vector<8xf32>
    %180 = vector.shape_cast %179 : vector<8xf32> to vector<8x1xf32>
    %181 = vector.broadcast %180 : vector<8x1xf32> to vector<8x8xf32>
    %182 = arith.subf %178, %181 : vector<8x8xf32>
    %183 = math.exp %182 : vector<8x8xf32>
    %cst_47 = arith.constant dense<0.000000e+00> : vector<8xf32>
    %184 = vector.multi_reduction <add>, %183, %cst_47 [1] : vector<8x8xf32> to vector<8xf32>
    %185 = vector.shape_cast %184 : vector<8xf32> to vector<8x1xf32>
    %186 = arith.truncf %183 : vector<8x8xf32> to vector<8x8xbf16>
    "tpu.trace_start"() <{level = 10 : i32, message = "nm,md->nd"}> : () -> ()
    %cst_48 = arith.constant dense<0.000000e+00> : vector<8x4xf32>
    %187 = tpu.matmul %186, %177, %cst_48 {dimension_numbers = #tpu.dot_dimension_numbers<[1], [0], [0], [1], [0, 0, 1, 1], [], []>} : vector<8x8xbf16>, vector<8x4xbf16>, vector<8x4xf32> -> vector<8x4xf32>
    "tpu.trace_stop"() : () -> ()
    %188 = tpu.reciprocal %185 {approx = true} : vector<8x1xf32> -> vector<8x1xf32>
    %189 = vector.broadcast %188 : vector<8x1xf32> to vector<8x4xf32>
    %190 = arith.mulf %187, %189 : vector<8x4xf32>
    %191 = arith.truncf %190 : vector<8x4xf32> to vector<8x4xbf16>
    %192 = tpu.concatenate %51, %71, %91, %111, %131, %151, %171, %191 in 1 : vector<8x4xbf16>, vector<8x4xbf16>, vector<8x4xbf16>, vector<8x4xbf16>, vector<8x4xbf16>, vector<8x4xbf16>, vector<8x4xbf16>, vector<8x4xbf16> -> vector<8x32xbf16>
    %cst_49 = arith.constant dense<0.000000e+00> : vector<8x32xf32>
    %193 = tpu.matmul %192, %4, %cst_49 {dimension_numbers = #tpu.dot_dimension_numbers<[1], [0], [0], [1], [0, 0, 1, 1], [], []>} : vector<8x32xbf16>, vector<32x32xbf16>, vector<8x32xf32> -> vector<8x32xf32>
    %194 = vector.broadcast %2 : vector<1x32xf32> to vector<8x32xf32>
    %195 = arith.addf %193, %194 : vector<8x32xf32>
    %196 = arith.index_cast %6 : i32 to index
    %c0_50 = arith.constant 0 : index
    %c0_51 = arith.constant 0 : index
    %197 = vector.load %arg7[%196, %c0_50, %c0_51] : memref<1x8x32xf32, #tpu.memory_space<vmem>>, vector<1x8x32xf32>
    %198 = vector.shape_cast %197 : vector<1x8x32xf32> to vector<8x32xf32>
    %199 = vector.shape_cast %195 : vector<8x32xf32> to vector<1x8x32xf32>
    tpu.vector_store %arg7[%196, %c0_50, %c0_51], %199 {strides = array<i32>} : memref<1x8x32xf32, #tpu.memory_space<vmem>>, vector<1x8x32xf32>,
    %c1_i32_52 = arith.constant 1 : i32
    return
  }
  func.func @transform_0(%arg0: i32) -> (i32, i32, i32) {
    %c0_i32 = arith.constant 0 : i32
    %c0_i32_0 = arith.constant 0 : i32
    %c0_i32_1 = arith.constant 0 : i32
    return %arg0, %c0_i32, %c0_i32_0 : i32, i32, i32
  }
  func.func @transform_1(%arg0: i32) -> (i32, i32) {
    %c0_i32 = arith.constant 0 : i32
    %c0_i32_0 = arith.constant 0 : i32
    %c0_i32_1 = arith.constant 0 : i32
    return %c0_i32, %c0_i32_0 : i32, i32
  }
  func.func @transform_2(%arg0: i32) -> (i32, i32) {
    %c0_i32 = arith.constant 0 : i32
    %c0_i32_0 = arith.constant 0 : i32
    %c0_i32_1 = arith.constant 0 : i32
    return %c0_i32, %c0_i32_0 : i32, i32
  }
  func.func @transform_3(%arg0: i32) -> (i32, i32) {
    %c0_i32 = arith.constant 0 : i32
    %c0_i32_0 = arith.constant 0 : i32
    %c0_i32_1 = arith.constant 0 : i32
    return %c0_i32, %c0_i32_0 : i32, i32
  }
  func.func @transform_4(%arg0: i32) -> (i32, i32) {
    %c0_i32 = arith.constant 0 : i32
    %c0_i32_0 = arith.constant 0 : i32
    %c0_i32_1 = arith.constant 0 : i32
    return %c0_i32, %c0_i32_0 : i32, i32
  }
  func.func @transform_5(%arg0: i32) -> (i32, i32) {
    %c0_i32 = arith.constant 0 : i32
    %c0_i32_0 = arith.constant 0 : i32
    %c0_i32_1 = arith.constant 0 : i32
    return %c0_i32, %c0_i32_0 : i32, i32
  }
  func.func @transform_6(%arg0: i32) -> (i32, i32, i32) {
    %c0_i32 = arith.constant 0 : i32
    %c0_i32_0 = arith.constant 0 : i32
    %c0_i32_1 = arith.constant 0 : i32
    return %arg0, %c0_i32, %c0_i32_0 : i32, i32, i32
  }
}

</mosaic_0001>

<llo_original>
// kernel: tpu_custom_call.1
$region0: #{tpu_custom_call.1}
  #allocation0 [shape = 'u32[]', space=smem, size = 0x4, offset = 0x4, fixed_abs, tag = 'smem constant byte address 0x4 - core index']
  #allocation1 [shape = 'u32[72,128]{1,0:T(1,128)}', space=vmem, size = 0x9000, scoped, tag = 'internal scratch']
  %s0 = inlined_call_operand.hbm [shape: f32[2,8,32], index: 0, kind: input, shape index: {}]
  %s1 = inlined_call_operand.hbm [shape: f32[1,32], index: 1, kind: input, shape index: {}]
  %s2 = inlined_call_operand.vmem [shape: f32[1,32], index: 2, kind: input, shape index: {}]
  %s3 = inlined_call_operand.hbm [shape: bf16[32,96], index: 3, kind: input, shape index: {}]
  %s4 = inlined_call_operand.hbm [shape: bf16[32,32], index: 4, kind: input, shape index: {}]
  %s5 = inlined_call_operand.vmem [shape: f32[1,32], index: 5, kind: input, shape index: {}]
  %s6 = inlined_call_operand.hbm [shape: f32[2,8,32], index: 6, kind: output, shape index: {}]
  %s7 = sld [smem:[#allocation0]]
  $region73: #{tpu_custom_call.1} parent=0
    _
  %s9 = ssub.s32 1, %s7
  %s10 = scalar_select 0, %s9, %s7
  $region1: #{tpu_custom_call.1} parent=0
    #allocation2 [shape = 'u8[8192]{0}', space=vmem, size = 0x2000, scoped, tag = 'input window, operand 0']
    #allocation3 [shape = 's32[2]{0}', space=sflag, size = 0x8, scoped, tag = 'scoped memory for tpu_custom_call.1']
    #allocation4 [shape = 's32[2]{0}', space=sflag, size = 0x8, scoped, tag = 'scoped memory for tpu_custom_call.1']
    #allocation5 [shape = 'u8[512]{0}', space=vmem, size = 0x400, scoped, tag = 'input window, operand 1, single buffered']
    #allocation6 [shape = 's32[1]{0}', space=sflag, size = 0x4, scoped, tag = 'scoped memory for tpu_custom_call.1']
    #allocation7 [shape = 'u8[8192]{0}', space=vmem, size = 0x2000, scoped, tag = 'input window, operand 3, single buffered']
    #allocation8 [shape = 'u8[8192]{0}', space=vmem, size = 0x2000, scoped, tag = 'input window, operand 4, single buffered']
    #allocation9 [shape = 's32[1]{0}', space=sflag, size = 0x4, scoped, tag = 'scoped memory for tpu_custom_call.1']
    #allocation10 [shape = 'u8[8192]{0}', space=vmem, size = 0x2000, scoped, tag = 'output window, operand 0']
    %11 = vsyncpa [#allocation3], 0
    %s12 = scalar_lea.sflag [#allocation3], 1
    %13 = vsyncpa %s12, 0
    %14 = vsyncpa [#allocation6], 0
    %15 = vsyncpa [#allocation9], 0
    %16 = vsyncpa [#allocation4], 0
    %s17 = scalar_lea.sflag [#allocation4], 1
    %18 = vsyncpa %s17, 0
    loop: start=0, step=1, limit=4
    $region2: #{tpu_custom_call.1} parent=1 // loop_pre_header
      _
    $region3: #{tpu_custom_call.1} parent=1 // loop_header
      %s20 = sphi 0, %s24
      %p21 = scmp.ge.s32.totalorder %s20, 4
      %s30 = sphi 0, %s32
      %s33 = sphi 0, %s30
      %s34 = sphi 0, %s33
      %s50 = sphi 0, %s34
      %s54 = sphi 0, %s54
      %s56 = sphi 0, %s54
      %s57 = sphi 0, %s56
      %s71 = sphi 0, %s57
      %s75 = sphi 0, %s75
      %s77 = sphi 0, %s75
      %s78 = sphi 0, %s77
      %s92 = sphi 0, %s78
      %s96 = sphi 0, %s96
      %s98 = sphi 0, %s96
      %s99 = sphi 0, %s98
      %s113 = sphi 0, %s99
      %s117 = sphi 0, %s117
      %s119 = sphi 0, %s117
      %s120 = sphi 0, %s119
      %s134 = sphi 0, %s120
      %s138 = sphi 0, %s138
      %s140 = sphi 0, %s138
      %s141 = sphi 0, %s140
      %s155 = sphi 0, %s141
      %s161 = sphi 0, %s163
      %s164 = sphi 0, %s161
      %s165 = sphi 0, %s164
      %s181 = sphi 0, %s165
    $region4: #{tpu_custom_call.1} parent=1 // loop_header_branch
      %23 = sbr.rel (%p21) target = $region8
    $region5: #{tpu_custom_call.1} parent=1 // loop_body
      %s25 = ssub.s32 %s20, 1
      %s26 = ssub.s32 %s20, 2
      %s27 = sadd.s32 %s20, 1
      %s28 = ssub.s32 %s20, %s27
      %p29 = scmp.eq.s32.totalorder %s28, 0
      %s31 = sadd.s32 %s30, 1
      %s32 = scalar_select %p29, %s30, %s31
      %p35 = pneg %p29
      %p36 = scmp.eq.s32.totalorder %s20, 1
      %p37 = por %p35, %p36
      %p38 = scmp.ne.s32.totalorder %s30, %s33
      %p39 = scmp.eq.s32.totalorder %s20, 0
      %p40 = por %p38, %p39
      %p41 = scmp.ne.s32.totalorder %s30, %s33
      %p42 = scmp.eq.s32.totalorder %s25, 1
      %p43 = por %p41, %p42
      %p44 = scmp.ne.s32.totalorder %s33, %s34
      %p45 = scmp.eq.s32.totalorder %s25, 0
      %p46 = por %p44, %p45
      %p47 = scmp.ne.s32.totalorder %s33, %s34
      %p48 = scmp.eq.s32.totalorder %s26, 1
      %p49 = por %p47, %p48
      %p51 = scmp.ne.s32.totalorder %s34, %s50
      %p52 = scmp.eq.s32.totalorder %s26, 0
      %p53 = por %p51, %p52
      %s55 = sadd.s32 %s54, 1
      %p58 = scmp.eq.s32.totalorder %s20, 1
      %p59 = scmp.ne.s32.totalorder %s54, %s56
      %p60 = scmp.eq.s32.totalorder %s20, 0
      %p61 = por %p59, %p60
      %p62 = scmp.ne.s32.totalorder %s54, %s56
      %p63 = scmp.eq.s32.totalorder %s25, 1
      %p64 = por %p62, %p63
      %p65 = scmp.ne.s32.totalorder %s56, %s57
      %p66 = scmp.eq.s32.totalorder %s25, 0
      %p67 = por %p65, %p66
      %p68 = scmp.ne.s32.totalorder %s56, %s57
      %p69 = scmp.eq.s32.totalorder %s26, 1
      %p70 = por %p68, %p69
      %p72 = scmp.ne.s32.totalorder %s57, %s71
      %p73 = scmp.eq.s32.totalorder %s26, 0
      %p74 = por %p72, %p73
      %s76 = sadd.s32 %s75, 1
      %p79 = scmp.eq.s32.totalorder %s20, 1
      %p80 = scmp.ne.s32.totalorder %s75, %s77
      %p81 = scmp.eq.s32.totalorder %s20, 0
      %p82 = por %p80, %p81
      %p83 = scmp.ne.s32.totalorder %s75, %s77
      %p84 = scmp.eq.s32.totalorder %s25, 1
      %p85 = por %p83, %p84
      %p86 = scmp.ne.s32.totalorder %s77, %s78
      %p87 = scmp.eq.s32.totalorder %s25, 0
      %p88 = por %p86, %p87
      %p89 = scmp.ne.s32.totalorder %s77, %s78
      %p90 = scmp.eq.s32.totalorder %s26, 1
      %p91 = por %p89, %p90
      %p93 = scmp.ne.s32.totalorder %s78, %s92
      %p94 = scmp.eq.s32.totalorder %s26, 0
      %p95 = por %p93, %p94
      %s97 = sadd.s32 %s96, 1
      %p100 = scmp.eq.s32.totalorder %s20, 1
      %p101 = scmp.ne.s32.totalorder %s96, %s98
      %p102 = scmp.eq.s32.totalorder %s20, 0
      %p103 = por %p101, %p102
      %p104 = scmp.ne.s32.totalorder %s96, %s98
      %p105 = scmp.eq.s32.totalorder %s25, 1
      %p106 = por %p104, %p105
      %p107 = scmp.ne.s32.totalorder %s98, %s99
      %p108 = scmp.eq.s32.totalorder %s25, 0
      %p109 = por %p107, %p108
      %p110 = scmp.ne.s32.totalorder %s98, %s99
      %p111 = scmp.eq.s32.totalorder %s26, 1
      %p112 = por %p110, %p111
      %p114 = scmp.ne.s32.totalorder %s99, %s113
      %p115 = scmp.eq.s32.totalorder %s26, 0
      %p116 = por %p114, %p115
      %s118 = sadd.s32 %s117, 1
      %p121 = scmp.eq.s32.totalorder %s20, 1
      %p122 = scmp.ne.s32.totalorder %s117, %s119
      %p123 = scmp.eq.s32.totalorder %s20, 0
      %p124 = por %p122, %p123
      %p125 = scmp.ne.s32.totalorder %s117, %s119
      %p126 = scmp.eq.s32.totalorder %s25, 1
      %p127 = por %p125, %p126
      %p128 = scmp.ne.s32.totalorder %s119, %s120
      %p129 = scmp.eq.s32.totalorder %s25, 0
      %p130 = por %p128, %p129
      %p131 = scmp.ne.s32.totalorder %s119, %s120
      %p132 = scmp.eq.s32.totalorder %s26, 1
      %p133 = por %p131, %p132
      %p135 = scmp.ne.s32.totalorder %s120, %s134
      %p136 = scmp.eq.s32.totalorder %s26, 0
      %p137 = por %p135, %p136
      %s139 = sadd.s32 %s138, 1
      %p142 = scmp.eq.s32.totalorder %s20, 1
      %p143 = scmp.ne.s32.totalorder %s138, %s140
      %p144 = scmp.eq.s32.totalorder %s20, 0
      %p145 = por %p143, %p144
      %p146 = scmp.ne.s32.totalorder %s138, %s140
      %p147 = scmp.eq.s32.totalorder %s25, 1
      %p148 = por %p146, %p147
      %p149 = scmp.ne.s32.totalorder %s140, %s141
      %p150 = scmp.eq.s32.totalorder %s25, 0
      %p151 = por %p149, %p150
      %p152 = scmp.ne.s32.totalorder %s140, %s141
      %p153 = scmp.eq.s32.totalorder %s26, 1
      %p154 = por %p152, %p153
      %p156 = scmp.ne.s32.totalorder %s141, %s155
      %p157 = scmp.eq.s32.totalorder %s26, 0
      %p158 = por %p156, %p157
      %s159 = ssub.s32 %s20, %s27
      %p160 = scmp.eq.s32.totalorder %s159, 0
      %s162 = sadd.s32 %s161, 1
      %s163 = scalar_select %p160, %s161, %s162
      %p166 = pneg %p160
      %p167 = scmp.eq.s32.totalorder %s20, 1
      %p168 = por %p166, %p167
      %p169 = scmp.ne.s32.totalorder %s161, %s164
      %p170 = scmp.eq.s32.totalorder %s20, 0
      %p171 = por %p169, %p170
      %p172 = scmp.ne.s32.totalorder %s161, %s164
      %p173 = scmp.eq.s32.totalorder %s25, 1
      %p174 = por %p172, %p173
      %p175 = scmp.ne.s32.totalorder %s164, %s165
      %p176 = scmp.eq.s32.totalorder %s25, 0
      %p177 = por %p175, %p176
      %p178 = scmp.ne.s32.totalorder %s164, %s165
      %p179 = scmp.eq.s32.totalorder %s26, 1
      %p180 = por %p178, %p179
      %p182 = scmp.ne.s32.totalorder %s165, %s181
      %p183 = scmp.eq.s32.totalorder %s26, 0
      %p184 = por %p182, %p183
      %p185 = scmp.le.s32.totalorder 1, %s20
      %p186 = scmp.lt.s32.totalorder %s20, 3
      %p187 = pnand %p185, %p186
      %p188 = pneg %p187
      // Predicated region
      $region9: #{tpu_custom_call.1} parent=5 // pred_check
        _
      $region10: #{tpu_custom_call.1} parent=5 // pred_check_branch
        %190 = sbr.rel (%p187) target = $region12
      $region11: #{tpu_custom_call.1} parent=5 // pred_region
        %s191 = ssub.s32 %s20, 1
        // Predicated region
        $region13: #{tpu_custom_call.1} parent=11 // pred_check
          %p192 = pneg %p67
        $region14: #{tpu_custom_call.1} parent=11 // pred_check_branch
          %194 = sbr.rel (%p192) target = $region16
        $region15: #{tpu_custom_call.1} parent=11 // pred_region
          %196 = vsyncadd [#allocation6], 0
          %s198 = sshll.u32 %s1, 4
          %s199 = int_to_ptr.hbm [resolvable:$true] %s198
          %s200 = sshll.u32 [#allocation5], 4
          %s201 = int_to_ptr.vmem [resolvable:$true] %s200
          %203 = dma.hbm_to_vmem [thread:$0]  %s199, 16, %s201, [#allocation6]
        $region16: #{tpu_custom_call.1} parent=11 // pred_fallthru
          _
        // Predicated region
        $region17: #{tpu_custom_call.1} parent=11 // pred_check
          %p204 = pneg %p88
        $region18: #{tpu_custom_call.1} parent=11 // pred_check_branch
          %206 = sbr.rel (%p204) target = $region20
        $region19: #{tpu_custom_call.1} parent=11 // pred_region
          _
        $region20: #{tpu_custom_call.1} parent=11 // pred_fallthru
          _
        // Predicated region
        $region21: #{tpu_custom_call.1} parent=11 // pred_check
          %p207 = pneg %p109
        $region22: #{tpu_custom_call.1} parent=11 // pred_check_branch
          %209 = sbr.rel (%p207) target = $region24
        $region23: #{tpu_custom_call.1} parent=11 // pred_region
          %211 = vsyncadd [#allocation6], 0
          %s212 = sshll.u32 %s3, 4
          %s213 = int_to_ptr.hbm [resolvable:$true] %s212
          %s214 = sshll.u32 [#allocation7], 4
          %s215 = int_to_ptr.vmem [resolvable:$true] %s214
          %220 = dma.hbm_to_vmem [thread:$0]  %s213, 256, %s215, [#allocation6], 64, 64, 4
        $region24: #{tpu_custom_call.1} parent=11 // pred_fallthru
          _
        // Predicated region
        $region25: #{tpu_custom_call.1} parent=11 // pred_check
          %p221 = pneg %p130
        $region26: #{tpu_custom_call.1} parent=11 // pred_check_branch
          %223 = sbr.rel (%p221) target = $region28
        $region27: #{tpu_custom_call.1} parent=11 // pred_region
          %225 = vsyncadd [#allocation9], 0
          %s226 = sshll.u32 %s4, 4
          %s227 = int_to_ptr.hbm [resolvable:$true] %s226
          %s228 = sshll.u32 [#allocation8], 4
          %s229 = int_to_ptr.vmem [resolvable:$true] %s228
          %234 = dma.hbm_to_vmem [thread:$0]  %s227, 256, %s229, [#allocation9], 64, 64, 4
        $region28: #{tpu_custom_call.1} parent=11 // pred_fallthru
          _
        // Predicated region
        $region29: #{tpu_custom_call.1} parent=11 // pred_check
          %p235 = pneg %p151
        $region30: #{tpu_custom_call.1} parent=11 // pred_check_branch
          %237 = sbr.rel (%p235) target = $region32
        $region31: #{tpu_custom_call.1} parent=11 // pred_region
          _
        $region32: #{tpu_custom_call.1} parent=11 // pred_fallthru
          _
      $region12: #{tpu_custom_call.1} parent=5 // pred_fallthru
        _
      %p238 = scmp.lt.s32.totalorder %s20, 2
      // Predicated region
      $region33: #{tpu_custom_call.1} parent=5 // pred_check
        %p239 = pneg %p238
      $region34: #{tpu_custom_call.1} parent=5 // pred_check_branch
        %241 = sbr.rel (%p239) target = $region36
      $region35: #{tpu_custom_call.1} parent=5 // pred_region
        // Predicated region
        $region37: #{tpu_custom_call.1} parent=35 // pred_check
          %p242 = pneg %p40
        $region38: #{tpu_custom_call.1} parent=35 // pred_check_branch
          %244 = sbr.rel (%p242) target = $region40
        $region39: #{tpu_custom_call.1} parent=35 // pred_region
          %s245 = sand.u32 %s30, 1
          %s246 = scalar_lea.sflag [#allocation3], %s245
          %s247 = sand.u32 %s30, 1
          %s248 = smul.addr %s247, 8
          %s249 = scalar_lea.vmem [#allocation2], %s248
          %251 = vsyncadd %s246, 0
          %s252 = smul.addr %s20, 8
          %s253 = scalar_lea.hbm %s0, %s252
          %s255 = sshll.u32 %s253, 4
          %s256 = int_to_ptr.hbm [resolvable:$true] %s255
          %s257 = sshll.u32 %s249, 4
          %s258 = int_to_ptr.vmem [resolvable:$true] %s257
          %260 = dma.hbm_to_vmem [thread:$0]  %s256, 128, %s258, %s246
        $region40: #{tpu_custom_call.1} parent=35 // pred_fallthru
          _
      $region36: #{tpu_custom_call.1} parent=5 // pred_fallthru
        _
      %p261 = scmp.le.s32.totalorder 1, %s20
      %p262 = scmp.lt.s32.totalorder %s20, 3
      %p263 = pnand %p261, %p262
      %p264 = pneg %p263
      // Predicated region
      $region41: #{tpu_custom_call.1} parent=5 // pred_check
        _
      $region42: #{tpu_custom_call.1} parent=5 // pred_check_branch
        %266 = sbr.rel (%p263) target = $region44
      $region43: #{tpu_custom_call.1} parent=5 // pred_region
        %s267 = ssub.s32 %s20, 1
        %s268 = sand.u32 %s33, 1
        %s269 = scalar_lea.sflag [#allocation3], %s268
        %s270 = sand.u32 %s33, 1
        %s271 = smul.addr %s270, 8
        %s272 = scalar_lea.vmem [#allocation2], %s271
        // Predicated region
        $region45: #{tpu_custom_call.1} parent=43 // pred_check
          %p273 = pneg %p46
        $region46: #{tpu_custom_call.1} parent=43 // pred_check_branch
          %275 = sbr.rel (%p273) target = $region48
        $region47: #{tpu_custom_call.1} parent=43 // pred_region
          %277 = dma.done %s269, 128
        $region48: #{tpu_custom_call.1} parent=43 // pred_fallthru
          _
        // Predicated region
        $region49: #{tpu_custom_call.1} parent=43 // pred_check
          %p278 = pneg %p67
        $region50: #{tpu_custom_call.1} parent=43 // pred_check_branch
          %280 = sbr.rel (%p278) target = $region52
        $region51: #{tpu_custom_call.1} parent=43 // pred_region
          %282 = dma.done [#allocation6], 16
        $region52: #{tpu_custom_call.1} parent=43 // pred_fallthru
          _
        // Predicated region
        $region53: #{tpu_custom_call.1} parent=43 // pred_check
          %p283 = pneg %p109
        $region54: #{tpu_custom_call.1} parent=43 // pred_check_branch
          %285 = sbr.rel (%p283) target = $region56
        $region55: #{tpu_custom_call.1} parent=43 // pred_region
          %287 = dma.done [#allocation6], 256
        $region56: #{tpu_custom_call.1} parent=43 // pred_fallthru
          _
        // Predicated region
        $region57: #{tpu_custom_call.1} parent=43 // pred_check
          %p288 = pneg %p130
        $region58: #{tpu_custom_call.1} parent=43 // pred_check_branch
          %290 = sbr.rel (%p288) target = $region60
        $region59: #{tpu_custom_call.1} parent=43 // pred_region
          %292 = dma.done [#allocation9], 256
        $region60: #{tpu_custom_call.1} parent=43 // pred_fallthru
          _
        %s293 = sand.u32 %s33, 1
        %s294 = scalar_lea.sflag [#allocation3], %s293
        %s295 = sand.u32 %s33, 1
        %s296 = smul.addr %s295, 8
        %s297 = scalar_lea.vmem [#allocation2], %s296
        %p298 = pneg %p46
        %p299 = pneg %p43
        %p300 = pneg %p67
        %p301 = pneg %p64
        %p302 = pneg %p88
        %p303 = pneg %p85
        %p304 = pneg %p109
        %p305 = pneg %p106
        %p306 = pneg %p130
        %p307 = pneg %p127
        %p308 = pneg %p151
        %p309 = pneg %p148
        %p310 = pneg %p177
        %p311 = pneg %p174
        %s312 = sand.u32 %s164, 1
        %s313 = scalar_lea.sflag [#allocation4], %s312
        %s314 = sand.u32 %s164, 1
        %s315 = smul.addr %s314, 8
        %s316 = scalar_lea.vmem [#allocation10], %s315
        %v318 = vld [vmem:[#allocation5] sm:$0x1]
        %v319 = vld [vmem:[%s2] sm:$0x1]
        %v320 = vld [vmem:[%s5] sm:$0x1]
        %v321 = vld [vmem:[#allocation7] sm:$0xf]
        %v322 = vld [vmem:[#allocation7 + $0x4] sm:$0xf]
        %v323 = vld [vmem:[#allocation7 + $0x8] sm:$0xf]
        %v324 = vld [vmem:[#allocation7 + $0xc] sm:$0xf]
        %v325 = vld [vmem:[#allocation8] sm:$0xf]
        %v326 = vld [vmem:[#allocation8 + $0x4] sm:$0xf]
        %v327 = vld [vmem:[#allocation8 + $0x8] sm:$0xf]
        %v328 = vld [vmem:[#allocation8 + $0xc] sm:$0xf]
        %v329 = vld [vmem:[%s272] sm:$0xff]
        %vm330 = vcmask 261120
        %v331 = vsel %vm330, %v329, 0.0
        %332 = vadd.xlane.f32.xlu0 %v331
        %v333 = vpop.xlane.xlu0 %332
        %v334 = vrcp.pop 32.0
        %v335 = vmul.f32 32.0, %v334
        %v336 = vsub.f32 1.0, %v335
        %v337 = vmul.f32 %v334, %v336
        %v338 = vadd.f32 %v334, %v337
        %vm339 = vweird.f32 %v334
        %v340 = vsel %vm339, %v334, %v338
        %v341 = vmul.f32 %v333, %v340
        %v342 = vsub.f32 %v329, %v341
        %v343 = vmul.f32 %v342, %v342
        %v344 = vsel %vm330, %v343, 0.0
        %345 = vadd.xlane.f32.xlu0 %v344
        %v346 = vpop.xlane.xlu0 %345
        %v347 = vmul.f32 %v346, %v340
        %v348 = vadd.f32 %v347, 1e-05
        %v349 = vrsqrt.pop %v348
        %v350 = vmul.f32 %v349, %v348
        %v351 = vmul.f32 %v350, %v349
        %v352 = vmul.f32 0.5, %v351
        %v353 = vsub.f32 1.5, %v352
        %v354 = vmul.f32 %v349, %v353
        %vm355 = vweird.f32 %v348
        %vm356 = vweird.f32 %v349
        %vm357 = vmor %vm355, %vm356
        %v358 = vsel %vm357, %v349, %v354
        %v359 = vmul.f32 %v342, %v358
        %v361 = vperm.slane %v318, 0
        %v363 = vmul.f32 %v359, %v361
        %v365 = vperm.slane %v319, 0
        %v367 = vadd.f32 %v363, %v365
        %v368 = vpack.c.bf16 %v367, %v367
        %v373 = vunpack.c.l.b16 %v321
        %v374 = vunpack.c.l.b16 %v322
        %v375 = vunpack.c.l.b16 %v323
        %v376 = vunpack.c.l.b16 %v324
        %v377 = vpack.c.b16 %v374, %v373
        %v378 = vpack.c.b16 %v376, %v375
        %v382 = vsel %vm330, %v368, 0
        %384 = vmatpush.bf16.msra.mxu0 0
        %385 = vmatpush.bf16.msra.mxu0 0
        %386 = vmatpush.bf16.msra.mxu0 0
        %387 = vmatpush.bf16.msra.mxu0 0
        %388 = vmatpush.bf16.msra.mxu0 0
        %389 = vmatpush.bf16.msra.mxu0 0
        %390 = vmatpush.bf16.msra.mxu0 %v378
        %391 = vmatpush.bf16.msra.mxu0 %v377
        %392 = vmatmul.bf16.gmra.mxu0 %v382
        %v393 = vpop.f32.mrf.mxu0
        %v394 = vadd.f32 0.0, %v393
        %v395 = vpop.f32.mrf.mxu0
        %396 = vdwg.mxu0
        %v397 = vpack.c.bf16 %v394, %v394
        %399 = vrot.lane.b32.xlu0 %v397, 96
        %v400 = vpop.permute.xlu0 %399
        %vm401 = vcmask 31744
        %v403 = vsel %vm401, %v397, 0
        %v406 = vsel %vm401, %v400, 0
        %408 = vmatpush.bf16.xpose.msra.mxu0 0
        %409 = vmatpush.bf16.xpose.msra.mxu0 0
        %410 = vmatpush.bf16.xpose.msra.mxu0 0
        %411 = vmatpush.bf16.xpose.msra.mxu0 0
        %412 = vmatpush.bf16.xpose.msra.mxu0 0
        %413 = vmatpush.bf16.xpose.msra.mxu0 0
        %414 = vmatpush.bf16.xpose.msra.mxu0 0
        %415 = vmatpush.bf16.xpose.msra.mxu0 %v406
        %416 = vmatmul.bf16.gmra.mxu0 %v403
        %v417 = vpop.f32.mrf.mxu0
        %v418 = vadd.f32 0.0, %v417
        %v419 = vpop.f32.mrf.mxu0
        %420 = vdwg.mxu0
        %vm421 = vcmask 64512
        %v422 = vsel %vm421, %v418, -inf
        %423 = vmax.xlane.f32.xlu0 %v422
        %v424 = vpop.xlane.xlu0 %423
        %v425 = vsub.f32 %v418, %v424
        %v426 = vmul.f32 %v425, 1.442695
        %v427 = vpow.pop %v426
        %v428 = vsel %vm421, %v427, 0.0
        %429 = vadd.xlane.f32.xlu0 %v428
        %v430 = vpop.xlane.xlu0 %429
        %v431 = vpack.c.bf16 %v427, %v427
        %432 = vrot.lane.b32.xlu0 %v397, 64
        %v433 = vpop.permute.xlu0 %432
        %v435 = vsel %vm421, %v431, 0
        %vm437 = vcmask 1043456
        %v439 = vsel %vm437, %v433, 0
        %441 = vmatpush.bf16.msra.mxu0 0
        %442 = vmatpush.bf16.msra.mxu0 0
        %443 = vmatpush.bf16.msra.mxu0 0
        %444 = vmatpush.bf16.msra.mxu0 0
        %445 = vmatpush.bf16.msra.mxu0 0
        %446 = vmatpush.bf16.msra.mxu0 0
        %447 = vmatpush.bf16.msra.mxu0 0
        %448 = vmatpush.bf16.msra.mxu0 %v439
        %449 = vmatmul.bf16.gmra.mxu0 %v435
        %v450 = vpop.f32.mrf.mxu0
        %v451 = vadd.f32 0.0, %v450
        %v452 = vpop.f32.mrf.mxu0
        %453 = vdwg.mxu0
        %v454 = vrcp.pop %v430
        %v455 = vmul.f32 %v451, %v454
        %v456 = vpack.c.bf16 %v455, %v455
        %457 = vrot.lane.b32.xlu0 %v397, 124
        %v458 = vpop.permute.xlu0 %457
        %459 = vrot.lane.b32.xlu0 %v397, 92
        %v460 = vpop.permute.xlu0 %459
        %v462 = vsel %vm401, %v458, 0
        %v465 = vsel %vm401, %v460, 0
        %467 = vmatpush.bf16.xpose.msra.mxu0 0
        %468 = vmatpush.bf16.xpose.msra.mxu0 0
        %469 = vmatpush.bf16.xpose.msra.mxu0 0
        %470 = vmatpush.bf16.xpose.msra.mxu0 0
        %471 = vmatpush.bf16.xpose.msra.mxu0 0
        %472 = vmatpush.bf16.xpose.msra.mxu0 0
        %473 = vmatpush.bf16.xpose.msra.mxu0 0
        %474 = vmatpush.bf16.xpose.msra.mxu0 %v465
        %475 = vmatmul.bf16.gmra.mxu0 %v462
        %v476 = vpop.f32.mrf.mxu0
        %v477 = vadd.f32 0.0, %v476
        %v478 = vpop.f32.mrf.mxu0
        %479 = vdwg.mxu0
        %v480 = vsel %vm421, %v477, -inf
        %481 = vmax.xlane.f32.xlu0 %v480
        %v482 = vpop.xlane.xlu0 %481
        %v483 = vsub.f32 %v477, %v482
        %v484 = vmul.f32 %v483, 1.442695
        %v485 = vpow.pop %v484
        %v486 = vsel %vm421, %v485, 0.0
        %487 = vadd.xlane.f32.xlu0 %v486
        %v488 = vpop.xlane.xlu0 %487
        %v489 = vpack.c.bf16 %v485, %v485
        %490 = vrot.lane.b32.xlu0 %v397, 60
        %v491 = vpop.permute.xlu0 %490
        %v493 = vsel %vm421, %v489, 0
        %v496 = vsel %vm437, %v491, 0
        %498 = vmatpush.bf16.msra.mxu0 0
        %499 = vmatpush.bf16.msra.mxu0 0
        %500 = vmatpush.bf16.msra.mxu0 0
        %501 = vmatpush.bf16.msra.mxu0 0
        %502 = vmatpush.bf16.msra.mxu0 0
        %503 = vmatpush.bf16.msra.mxu0 0
        %504 = vmatpush.bf16.msra.mxu0 0
        %505 = vmatpush.bf16.msra.mxu0 %v496
        %506 = vmatmul.bf16.gmra.mxu0 %v493
        %v507 = vpop.f32.mrf.mxu0
        %v508 = vadd.f32 0.0, %v507
        %v509 = vpop.f32.mrf.mxu0
        %510 = vdwg.mxu0
        %v511 = vrcp.pop %v488
        %v512 = vmul.f32 %v508, %v511
        %v513 = vpack.c.bf16 %v512, %v512
        %514 = vrot.lane.b32.xlu0 %v397, 120
        %v515 = vpop.permute.xlu0 %514
        %516 = vrot.lane.b32.xlu0 %v397, 88
        %v517 = vpop.permute.xlu0 %516
        %v519 = vsel %vm401, %v515, 0
        %v522 = vsel %vm401, %v517, 0
        %524 = vmatpush.bf16.xpose.msra.mxu0 0
        %525 = vmatpush.bf16.xpose.msra.mxu0 0
        %526 = vmatpush.bf16.xpose.msra.mxu0 0
        %527 = vmatpush.bf16.xpose.msra.mxu0 0
        %528 = vmatpush.bf16.xpose.msra.mxu0 0
        %529 = vmatpush.bf16.xpose.msra.mxu0 0
        %530 = vmatpush.bf16.xpose.msra.mxu0 0
        %531 = vmatpush.bf16.xpose.msra.mxu0 %v522
        %532 = vmatmul.bf16.gmra.mxu0 %v519
        %v533 = vpop.f32.mrf.mxu0
        %v534 = vadd.f32 0.0, %v533
        %v535 = vpop.f32.mrf.mxu0
        %536 = vdwg.mxu0
        %v537 = vsel %vm421, %v534, -inf
        %538 = vmax.xlane.f32.xlu0 %v537
        %v539 = vpop.xlane.xlu0 %538
        %v540 = vsub.f32 %v534, %v539
        %v541 = vmul.f32 %v540, 1.442695
        %v542 = vpow.pop %v541
        %v543 = vsel %vm421, %v542, 0.0
        %544 = vadd.xlane.f32.xlu0 %v543
        %v545 = vpop.xlane.xlu0 %544
        %v546 = vpack.c.bf16 %v542, %v542
        %547 = vrot.lane.b32.xlu0 %v397, 56
        %v548 = vpop.permute.xlu0 %547
        %v550 = vsel %vm421, %v546, 0
        %v553 = vsel %vm437, %v548, 0
        %555 = vmatpush.bf16.msra.mxu0 0
        %556 = vmatpush.bf16.msra.mxu0 0
        %557 = vmatpush.bf16.msra.mxu0 0
        %558 = vmatpush.bf16.msra.mxu0 0
        %559 = vmatpush.bf16.msra.mxu0 0
        %560 = vmatpush.bf16.msra.mxu0 0
        %561 = vmatpush.bf16.msra.mxu0 0
        %562 = vmatpush.bf16.msra.mxu0 %v553
        %563 = vmatmul.bf16.gmra.mxu0 %v550
        %v564 = vpop.f32.mrf.mxu0
        %v565 = vadd.f32 0.0, %v564
        %v566 = vpop.f32.mrf.mxu0
        %567 = vdwg.mxu0
        %v568 = vrcp.pop %v545
        %v569 = vmul.f32 %v565, %v568
        %v570 = vpack.c.bf16 %v569, %v569
        %571 = vrot.lane.b32.xlu0 %v397, 116
        %v572 = vpop.permute.xlu0 %571
        %573 = vrot.lane.b32.xlu0 %v397, 84
        %v574 = vpop.permute.xlu0 %573
        %v576 = vsel %vm401, %v572, 0
        %v579 = vsel %vm401, %v574, 0
        %581 = vmatpush.bf16.xpose.msra.mxu0 0
        %582 = vmatpush.bf16.xpose.msra.mxu0 0
        %583 = vmatpush.bf16.xpose.msra.mxu0 0
        %584 = vmatpush.bf16.xpose.msra.mxu0 0
        %585 = vmatpush.bf16.xpose.msra.mxu0 0
        %586 = vmatpush.bf16.xpose.msra.mxu0 0
        %587 = vmatpush.bf16.xpose.msra.mxu0 0
        %588 = vmatpush.bf16.xpose.msra.mxu0 %v579
        %589 = vmatmul.bf16.gmra.mxu0 %v576
        %v590 = vpop.f32.mrf.mxu0
        %v591 = vadd.f32 0.0, %v590
        %v592 = vpop.f32.mrf.mxu0
        %593 = vdwg.mxu0
        %v594 = vsel %vm421, %v591, -inf
        %595 = vmax.xlane.f32.xlu0 %v594
        %v596 = vpop.xlane.xlu0 %595
        %v597 = vsub.f32 %v591, %v596
        %v598 = vmul.f32 %v597, 1.442695
        %v599 = vpow.pop %v598
        %v600 = vsel %vm421, %v599, 0.0
        %601 = vadd.xlane.f32.xlu0 %v600
        %v602 = vpop.xlane.xlu0 %601
        %v603 = vpack.c.bf16 %v599, %v599
        %604 = vrot.lane.b32.xlu0 %v397, 52
        %v605 = vpop.permute.xlu0 %604
        %v607 = vsel %vm421, %v603, 0
        %v610 = vsel %vm437, %v605, 0
        %612 = vmatpush.bf16.msra.mxu0 0
        %613 = vmatpush.bf16.msra.mxu0 0
        %614 = vmatpush.bf16.msra.mxu0 0
        %615 = vmatpush.bf16.msra.mxu0 0
        %616 = vmatpush.bf16.msra.mxu0 0
        %617 = vmatpush.bf16.msra.mxu0 0
        %618 = vmatpush.bf16.msra.mxu0 0
        %619 = vmatpush.bf16.msra.mxu0 %v610
        %620 = vmatmul.bf16.gmra.mxu0 %v607
        %v621 = vpop.f32.mrf.mxu0
        %v622 = vadd.f32 0.0, %v621
        %v623 = vpop.f32.mrf.mxu0
        %624 = vdwg.mxu0
        %v625 = vrcp.pop %v602
        %v626 = vmul.f32 %v622, %v625
        %v627 = vpack.c.bf16 %v626, %v626
        %628 = vrot.lane.b32.xlu0 %v397, 112
        %v629 = vpop.permute.xlu0 %628
        %630 = vrot.lane.b32.xlu0 %v397, 80
        %v631 = vpop.permute.xlu0 %630
        %v633 = vsel %vm401, %v629, 0
        %v636 = vsel %vm401, %v631, 0
        %638 = vmatpush.bf16.xpose.msra.mxu0 0
        %639 = vmatpush.bf16.xpose.msra.mxu0 0
        %640 = vmatpush.bf16.xpose.msra.mxu0 0
        %641 = vmatpush.bf16.xpose.msra.mxu0 0
        %642 = vmatpush.bf16.xpose.msra.mxu0 0
        %643 = vmatpush.bf16.xpose.msra.mxu0 0
        %644 = vmatpush.bf16.xpose.msra.mxu0 0
        %645 = vmatpush.bf16.xpose.msra.mxu0 %v636
        %646 = vmatmul.bf16.gmra.mxu0 %v633
        %v647 = vpop.f32.mrf.mxu0
        %v648 = vadd.f32 0.0, %v647
        %v649 = vpop.f32.mrf.mxu0
        %650 = vdwg.mxu0
        %v651 = vsel %vm421, %v648, -inf
        %652 = vmax.xlane.f32.xlu0 %v651
        %v653 = vpop.xlane.xlu0 %652
        %v654 = vsub.f32 %v648, %v653
        %v655 = vmul.f32 %v654, 1.442695
        %v656 = vpow.pop %v655
        %v657 = vsel %vm421, %v656, 0.0
        %658 = vadd.xlane.f32.xlu0 %v657
        %v659 = vpop.xlane.xlu0 %658
        %v660 = vpack.c.bf16 %v656, %v656
        %661 = vrot.lane.b32.xlu0 %v397, 48
        %v662 = vpop.permute.xlu0 %661
        %v664 = vsel %vm421, %v660, 0
        %v667 = vsel %vm437, %v662, 0
        %669 = vmatpush.bf16.msra.mxu0 0
        %670 = vmatpush.bf16.msra.mxu0 0
        %671 = vmatpush.bf16.msra.mxu0 0
        %672 = vmatpush.bf16.msra.mxu0 0
        %673 = vmatpush.bf16.msra.mxu0 0
        %674 = vmatpush.bf16.msra.mxu0 0
        %675 = vmatpush.bf16.msra.mxu0 0
        %676 = vmatpush.bf16.msra.mxu0 %v667
        %677 = vmatmul.bf16.gmra.mxu0 %v664
        %v678 = vpop.f32.mrf.mxu0
        %v679 = vadd.f32 0.0, %v678
        %v680 = vpop.f32.mrf.mxu0
        %681 = vdwg.mxu0
        %v682 = vrcp.pop %v659
        %v683 = vmul.f32 %v679, %v682
        %v684 = vpack.c.bf16 %v683, %v683
        %685 = vrot.lane.b32.xlu0 %v397, 108
        %v686 = vpop.permute.xlu0 %685
        %687 = vrot.lane.b32.xlu0 %v397, 76
        %v688 = vpop.permute.xlu0 %687
        %v690 = vsel %vm401, %v686, 0
        %v693 = vsel %vm401, %v688, 0
        %695 = vmatpush.bf16.xpose.msra.mxu0 0
        %696 = vmatpush.bf16.xpose.msra.mxu0 0
        %697 = vmatpush.bf16.xpose.msra.mxu0 0
        %698 = vmatpush.bf16.xpose.msra.mxu0 0
        %699 = vmatpush.bf16.xpose.msra.mxu0 0
        %700 = vmatpush.bf16.xpose.msra.mxu0 0
        %701 = vmatpush.bf16.xpose.msra.mxu0 0
        %702 = vmatpush.bf16.xpose.msra.mxu0 %v693
        %703 = vmatmul.bf16.gmra.mxu0 %v690
        %v704 = vpop.f32.mrf.mxu0
        %v705 = vadd.f32 0.0, %v704
        %v706 = vpop.f32.mrf.mxu0
        %707 = vdwg.mxu0
        %v708 = vsel %vm421, %v705, -inf
        %709 = vmax.xlane.f32.xlu0 %v708
        %v710 = vpop.xlane.xlu0 %709
        %v711 = vsub.f32 %v705, %v710
        %v712 = vmul.f32 %v711, 1.442695
        %v713 = vpow.pop %v712
        %v714 = vsel %vm421, %v713, 0.0
        %715 = vadd.xlane.f32.xlu0 %v714
        %v716 = vpop.xlane.xlu0 %715
        %v717 = vpack.c.bf16 %v713, %v713
        %718 = vrot.lane.b32.xlu0 %v397, 44
        %v719 = vpop.permute.xlu0 %718
        %v721 = vsel %vm421, %v717, 0
        %v724 = vsel %vm437, %v719, 0
        %726 = vmatpush.bf16.msra.mxu0 0
        %727 = vmatpush.bf16.msra.mxu0 0
        %728 = vmatpush.bf16.msra.mxu0 0
        %729 = vmatpush.bf16.msra.mxu0 0
        %730 = vmatpush.bf16.msra.mxu0 0
        %731 = vmatpush.bf16.msra.mxu0 0
        %732 = vmatpush.bf16.msra.mxu0 0
        %733 = vmatpush.bf16.msra.mxu0 %v724
        %734 = vmatmul.bf16.gmra.mxu0 %v721
        %v735 = vpop.f32.mrf.mxu0
        %v736 = vadd.f32 0.0, %v735
        %v737 = vpop.f32.mrf.mxu0
        %738 = vdwg.mxu0
        %v739 = vrcp.pop %v716
        %v740 = vmul.f32 %v736, %v739
        %v741 = vpack.c.bf16 %v740, %v740
        %742 = vrot.lane.b32.xlu0 %v397, 104
        %v743 = vpop.permute.xlu0 %742
        %744 = vrot.lane.b32.xlu0 %v397, 72
        %v745 = vpop.permute.xlu0 %744
        %v747 = vsel %vm401, %v743, 0
        %v750 = vsel %vm401, %v745, 0
        %752 = vmatpush.bf16.xpose.msra.mxu0 0
        %753 = vmatpush.bf16.xpose.msra.mxu0 0
        %754 = vmatpush.bf16.xpose.msra.mxu0 0
        %755 = vmatpush.bf16.xpose.msra.mxu0 0
        %756 = vmatpush.bf16.xpose.msra.mxu0 0
        %757 = vmatpush.bf16.xpose.msra.mxu0 0
        %758 = vmatpush.bf16.xpose.msra.mxu0 0
        %759 = vmatpush.bf16.xpose.msra.mxu0 %v750
        %760 = vmatmul.bf16.gmra.mxu0 %v747
        %v761 = vpop.f32.mrf.mxu0
        %v762 = vadd.f32 0.0, %v761
        %v763 = vpop.f32.mrf.mxu0
        %764 = vdwg.mxu0
        %v765 = vsel %vm421, %v762, -inf
        %766 = vmax.xlane.f32.xlu0 %v765
        %v767 = vpop.xlane.xlu0 %766
        %v768 = vsub.f32 %v762, %v767
        %v769 = vmul.f32 %v768, 1.442695
        %v770 = vpow.pop %v769
        %v771 = vsel %vm421, %v770, 0.0
        %772 = vadd.xlane.f32.xlu0 %v771
        %v773 = vpop.xlane.xlu0 %772
        %v774 = vpack.c.bf16 %v770, %v770
        %775 = vrot.lane.b32.xlu0 %v397, 40
        %v776 = vpop.permute.xlu0 %775
        %v778 = vsel %vm421, %v774, 0
        %v781 = vsel %vm437, %v776, 0
        %783 = vmatpush.bf16.msra.mxu0 0
        %784 = vmatpush.bf16.msra.mxu0 0
        %785 = vmatpush.bf16.msra.mxu0 0
        %786 = vmatpush.bf16.msra.mxu0 0
        %787 = vmatpush.bf16.msra.mxu0 0
        %788 = vmatpush.bf16.msra.mxu0 0
        %789 = vmatpush.bf16.msra.mxu0 0
        %790 = vmatpush.bf16.msra.mxu0 %v781
        %791 = vmatmul.bf16.gmra.mxu0 %v778
        %v792 = vpop.f32.mrf.mxu0
        %v793 = vadd.f32 0.0, %v792
        %v794 = vpop.f32.mrf.mxu0
        %795 = vdwg.mxu0
        %v796 = vrcp.pop %v773
        %v797 = vmul.f32 %v793, %v796
        %v798 = vpack.c.bf16 %v797, %v797
        %799 = vrot.lane.b32.xlu0 %v397, 100
        %v800 = vpop.permute.xlu0 %799
        %801 = vrot.lane.b32.xlu0 %v397, 68
        %v802 = vpop.permute.xlu0 %801
        %v804 = vsel %vm401, %v800, 0
        %v807 = vsel %vm401, %v802, 0
        %809 = vmatpush.bf16.xpose.msra.mxu0 0
        %810 = vmatpush.bf16.xpose.msra.mxu0 0
        %811 = vmatpush.bf16.xpose.msra.mxu0 0
        %812 = vmatpush.bf16.xpose.msra.mxu0 0
        %813 = vmatpush.bf16.xpose.msra.mxu0 0
        %814 = vmatpush.bf16.xpose.msra.mxu0 0
        %815 = vmatpush.bf16.xpose.msra.mxu0 0
        %816 = vmatpush.bf16.xpose.msra.mxu0 %v807
        %817 = vmatmul.bf16.gmra.mxu0 %v804
        %v818 = vpop.f32.mrf.mxu0
        %v819 = vadd.f32 0.0, %v818
        %v820 = vpop.f32.mrf.mxu0
        %821 = vdwg.mxu0
        %v822 = vsel %vm421, %v819, -inf
        %823 = vmax.xlane.f32.xlu0 %v822
        %v824 = vpop.xlane.xlu0 %823
        %v825 = vsub.f32 %v819, %v824
        %v826 = vmul.f32 %v825, 1.442695
        %v827 = vpow.pop %v826
        %v828 = vsel %vm421, %v827, 0.0
        %829 = vadd.xlane.f32.xlu0 %v828
        %v830 = vpop.xlane.xlu0 %829
        %v831 = vpack.c.bf16 %v827, %v827
        %832 = vrot.lane.b32.xlu0 %v397, 36
        %v833 = vpop.permute.xlu0 %832
        %v835 = vsel %vm421, %v831, 0
        %v838 = vsel %vm437, %v833, 0
        %840 = vmatpush.bf16.msra.mxu0 0
        %841 = vmatpush.bf16.msra.mxu0 0
        %842 = vmatpush.bf16.msra.mxu0 0
        %843 = vmatpush.bf16.msra.mxu0 0
        %844 = vmatpush.bf16.msra.mxu0 0
        %845 = vmatpush.bf16.msra.mxu0 0
        %846 = vmatpush.bf16.msra.mxu0 0
        %847 = vmatpush.bf16.msra.mxu0 %v838
        %848 = vmatmul.bf16.gmra.mxu0 %v835
        %v849 = vpop.f32.mrf.mxu0
        %v850 = vadd.f32 0.0, %v849
        %v851 = vpop.f32.mrf.mxu0
        %852 = vdwg.mxu0
        %v853 = vrcp.pop %v830
        %v854 = vmul.f32 %v850, %v853
        %v855 = vpack.c.bf16 %v854, %v854
        %v857 = vunpack.c.l.b16 %v513
        %v858 = vpack.c.b16 %v857, %v857
        %859 = vrot.lane.b32.xlu0 %v858, 4
        %v860 = vpop.permute.xlu0 %859
        %v862 = vunpack.c.l.b16 %v570
        %v863 = vpack.c.b16 %v862, %v862
        %864 = vrot.lane.b32.xlu0 %v863, 8
        %v865 = vpop.permute.xlu0 %864
        %v867 = vunpack.c.l.b16 %v627
        %v868 = vpack.c.b16 %v867, %v867
        %869 = vrot.lane.b32.xlu0 %v868, 12
        %v870 = vpop.permute.xlu0 %869
        %v872 = vunpack.c.l.b16 %v684
        %v873 = vpack.c.b16 %v872, %v872
        %874 = vrot.lane.b32.xlu0 %v873, 16
        %v875 = vpop.permute.xlu0 %874
        %v877 = vunpack.c.l.b16 %v741
        %v878 = vpack.c.b16 %v877, %v877
        %879 = vrot.lane.b32.xlu0 %v878, 20
        %v880 = vpop.permute.xlu0 %879
        %v882 = vunpack.c.l.b16 %v798
        %v883 = vpack.c.b16 %v882, %v882
        %884 = vrot.lane.b32.xlu0 %v883, 24
        %v885 = vpop.permute.xlu0 %884
        %v887 = vunpack.c.l.b16 %v855
        %v888 = vpack.c.b16 %v887, %v887
        %889 = vrot.lane.b32.xlu0 %v888, 28
        %v890 = vpop.permute.xlu0 %889
        %v893 = vsel %vm401, %v456, %v860
        %v895 = vsel %vm421, %v893, %v865
        %vm896 = vcmask 97280
        %v898 = vsel %vm896, %v895, %v870
        %vm899 = vcmask 130048
        %v901 = vsel %vm899, %v898, %v875
        %vm902 = vcmask 162816
        %v904 = vsel %vm902, %v901, %v880
        %vm905 = vcmask 195584
        %v907 = vsel %vm905, %v904, %v885
        %vm908 = vcmask 228352
        %v910 = vsel %vm908, %v907, %v890
        %v912 = vperm.slane %v320, 0
        %v918 = vunpack.c.l.b16 %v325
        %v919 = vunpack.c.l.b16 %v326
        %v920 = vunpack.c.l.b16 %v327
        %v921 = vunpack.c.l.b16 %v328
        %v922 = vpack.c.b16 %v919, %v918
        %v923 = vpack.c.b16 %v921, %v920
        %v926 = vsel %vm330, %v910, 0
        %928 = vmatpush.bf16.msra.mxu0 0
        %929 = vmatpush.bf16.msra.mxu0 0
        %930 = vmatpush.bf16.msra.mxu0 0
        %931 = vmatpush.bf16.msra.mxu0 0
        %932 = vmatpush.bf16.msra.mxu0 0
        %933 = vmatpush.bf16.msra.mxu0 0
        %934 = vmatpush.bf16.msra.mxu0 %v923
        %935 = vmatpush.bf16.msra.mxu0 %v922
        %936 = vmatmul.bf16.gmra.mxu0 %v926
        %v937 = vpop.f32.mrf.mxu0
        %v938 = vadd.f32 %v912, %v937
        %v939 = vpop.f32.mrf.mxu0
        %940 = vdwg.mxu0
        %941 = vst.msk [vmem:[%s316] sm:$0xff] %vm330, %v938
        %s942 = sand.u32 %s164, 1
        %s943 = scalar_lea.sflag [#allocation4], %s942
        %s944 = sand.u32 %s164, 1
        %s945 = smul.addr %s944, 8
        %s946 = scalar_lea.vmem [#allocation10], %s945
        // Predicated region
        $region61: #{tpu_custom_call.1} parent=43 // pred_check
          %p947 = pneg %p174
        $region62: #{tpu_custom_call.1} parent=43 // pred_check_branch
          %949 = sbr.rel (%p947) target = $region64
        $region63: #{tpu_custom_call.1} parent=43 // pred_region
          %951 = vsyncadd %s943, 0
          %s952 = smul.addr %s25, 8
          %s953 = scalar_lea.hbm %s6, %s952
          %s955 = sshll.u32 %s946, 4
          %s956 = int_to_ptr.vmem [resolvable:$true] %s955
          %s957 = sshll.u32 %s953, 4
          %s958 = int_to_ptr.hbm [resolvable:$true] %s957
          %960 = dma.vmem_to_hbm [thread:$0]  %s956, 128, %s958, %s943
        $region64: #{tpu_custom_call.1} parent=43 // pred_fallthru
          _
      $region44: #{tpu_custom_call.1} parent=5 // pred_fallthru
        _
      %p961 = scmp.le.s32.totalorder 2, %s20
      // Predicated region
      $region65: #{tpu_custom_call.1} parent=5 // pred_check
        %p962 = pneg %p961
      $region66: #{tpu_custom_call.1} parent=5 // pred_check_branch
        %964 = sbr.rel (%p962) target = $region68
      $region67: #{tpu_custom_call.1} parent=5 // pred_region
        %s965 = ssub.s32 %s20, 2
        // Predicated region
        $region69: #{tpu_custom_call.1} parent=67 // pred_check
          %p966 = pneg %p180
        $region70: #{tpu_custom_call.1} parent=67 // pred_check_branch
          %968 = sbr.rel (%p966) target = $region72
        $region71: #{tpu_custom_call.1} parent=67 // pred_region
          %s969 = sand.u32 %s165, 1
          %s970 = scalar_lea.sflag [#allocation4], %s969
          %s971 = sand.u32 %s165, 1
          %s972 = smul.addr %s971, 8
          %s973 = scalar_lea.vmem [#allocation10], %s972
          %975 = dma.done %s970, 128
        $region72: #{tpu_custom_call.1} parent=67 // pred_fallthru
          _
      $region68: #{tpu_custom_call.1} parent=5 // pred_fallthru
        _
    $region6: #{tpu_custom_call.1} parent=1 // loop_footer
      %s24 = sadd.s32 1, %s20
    $region7: #{tpu_custom_call.1} parent=1 // loop_footer_branch
      %19 = sbr.rel target = $region3
    $region8: #{tpu_custom_call.1} parent=1 // loop_exit
      _
    %976 = vsyncpa [#allocation3], 1
    %s977 = scalar_lea.sflag [#allocation3], 1
    %978 = vsyncpa %s977, 1
    %979 = vsyncpa [#allocation6], 1
    %980 = vsyncpa [#allocation9], 1
    %981 = vsyncpa [#allocation4], 1
    %s982 = scalar_lea.sflag [#allocation4], 1
    %983 = vsyncpa %s982, 1

</llo_original>
